<compile_context>
chip_gen: v7x
topology: tpu7x:2x2x1
jax: 0.10.0
libtpu: 0.0.40
codegen_flags: <defaults>
</compile_context>

<pallas_src>
import jax
import jax.numpy as jnp
from jax.experimental import pallas as pl
from jax.experimental.pallas import tpu as pltpu

_ROW_GRANULE = 16   # bf16 packed-sublane granule for the x tile


def _round_up(x, m):
    return (x + m - 1) // m * m


def _vmem_cap_bytes():
    """Per-core VMEM budget with ~15% headroom; conservative if undetectable."""
    try:
        cap = int(pltpu.get_tpu_info().vmem_capacity_bytes)
    except Exception:
        cap = 64 << 20   # safe on every generation (v7x has 64 MiB / TC)
    return int(cap * 0.85)


# ----------------------------------------------------------------------------
# Pallas kernel: fused Linear -> ReLU -> Linear on one [tm, F_in] tile.
# x arrives as raw f32 (cast to bf16 in-kernel), weights are bf16 MXU
# operands, biases f32, accumulation f32.
# ----------------------------------------------------------------------------
def _mlp_kernel(x_ref, w1_ref, b1_ref, w2_ref, b2_ref, out_ref):
    # In-kernel cast: avoids a separate host-side pad/cast HBM pass.
    x = x_ref[...].astype(jnp.bfloat16)
    # First linear: bf16 operands, f32 accumulate on the MXU (K = F_in, unpadded).
    h = jnp.dot(x, w1_ref[...], preferred_element_type=jnp.float32)
    # Bias + ReLU on the f32 accumulator; b1 is [1, H] and broadcasts.
    h = jnp.maximum(h + b1_ref[...], 0.0)
    # Second linear: downcast activations to bf16 for full MXU rate.
    o = jnp.dot(h.astype(jnp.bfloat16), w2_ref[...],
                preferred_element_type=jnp.float32)
    out_ref[...] = (o + b2_ref[...]).astype(out_ref.dtype)   # b2 is [1, F_out]


def _fused_mlp(x2d, w1, b1, w2, b2, *, out_dtype=jnp.float32, tm=2048):
    """x2d: [M, F_in] (f32) -> [M, F_out] out_dtype."""
    M, F_in = x2d.shape
    H = w1.shape[1]
    F_out = w2.shape[1]

    cap = _vmem_cap_bytes()
    in_isz = x2d.dtype.itemsize
    out_isz = jnp.dtype(out_dtype).itemsize
    par_bytes_1 = (w1.size * w1.dtype.itemsize + w2.size * w2.dtype.itemsize
                   + b1.size * b1.dtype.itemsize + b2.size * b2.dtype.itemsize)

    def footprint(t, param_bufs):
        act = 2 * t * (F_in * in_isz + F_out * out_isz)     # dbl-buffered x / out tiles
        tmp = t * (H * (4 + 2) + F_in * 2)                  # f32 h + bf16 h + bf16 x copies
        return act + tmp + param_bufs * par_bytes_1 + (4 << 20)

    # M tile: multiple of 16 rows (bf16 packed sublanes on the x path).
    tm = max(_ROW_GRANULE, _round_up(min(tm, M), _ROW_GRANULE))
    # Guarantee >= 2 grid steps when M allows it so the "parallel" axis can
    # shard across v7x's two TensorCores (no-op on single-TC v5e/v6e).
    if M > _ROW_GRANULE:
        tm = min(tm, _round_up(pl.cdiv(M, 2), _ROW_GRANULE))
    # Shrink the tile if its footprint would not fit the per-core VMEM budget.
    while tm > _ROW_GRANULE and footprint(tm, 2) > cap:
        tm = max(_ROW_GRANULE, _round_up(tm // 2, _ROW_GRANULE))

    # Pad a ragged M up to a multiple of the tile (rows only; feature dim raw).
    Mp = _round_up(M, tm)
    if Mp != M:
        x2d = jnp.pad(x2d, ((0, Mp - M), (0, 0)))
    grid = (Mp // tm,)

    cost = pl.CostEstimate(
        flops=2 * Mp * (F_in * H + H * F_out),
        transcendentals=0,
        bytes_accessed=Mp * (F_in * in_isz + F_out * out_isz) + par_bytes_1,
    )

    def _run(single_buffer_params):
        # Params: constant block index -> VMEM-resident across grid steps.
        # Single-buffer them when this JAX exposes pipeline_mode=pl.Buffered.
        param_specs = []
        sb = single_buffer_params
        for shp in (w1.shape, b1.shape, w2.shape, b2.shape):
            if sb:
                try:
                    param_specs.append(
                        pl.BlockSpec(shp, lambda i: (0, 0),
                                     pipeline_mode=pl.Buffered(1)))
                    continue
                except TypeError:
                    sb = False   # old signature: fall back to default buffering
            param_specs.append(pl.BlockSpec(shp, lambda i: (0, 0)))

        param_bufs = 1 if sb else 2
        vmem_limit = int(min(max(footprint(tm, param_bufs), 32 << 20), cap))

        return pl.pallas_call(
            _mlp_kernel,
            out_shape=jax.ShapeDtypeStruct((Mp, F_out), out_dtype),
            grid=grid,
            in_specs=[pl.BlockSpec((tm, F_in), lambda i: (i, 0))] + param_specs,
            out_specs=pl.BlockSpec((tm, F_out), lambda i: (i, 0)),
            compiler_params=pltpu.CompilerParams(
                dimension_semantics=("parallel",),   # M tiles are independent
                vmem_limit_bytes=vmem_limit,
            ),
            cost_estimate=cost,
        )(x2d, w1, b1, w2, b2)

    try:
        out = _run(single_buffer_params=True)
    except Exception:
        # pl.Buffered(1) not supported by this Mosaic build -> default buffering.
        out = _run(single_buffer_params=False)

    return out if Mp == M else out[:M]


# ----------------------------------------------------------------------------
# The wrapped module: Linear(F_in,H) -> ReLU -> Linear(H,F_out), Pallas-fused.
# Weights are bf16 MXU operands (no lane padding); biases stay f32 [1, N].
# ----------------------------------------------------------------------------
class SyntheticMLPModule:
    def __init__(self, w1, b1, w2, b2, *, tm=2048):
        self.f_in, self.hidden = w1.shape
        self.out_dim = w2.shape[1]
        self.tm = tm
        self.w1 = jnp.asarray(w1, jnp.bfloat16)
        self.w2 = jnp.asarray(w2, jnp.bfloat16)
        self.b1 = jnp.asarray(b1, jnp.float32).reshape(1, self.hidden)
        self.b2 = jnp.asarray(b2, jnp.float32).reshape(1, self.out_dim)

    def __call__(self, input_):
        B, T, F_in = input_.shape
        # No host-side pad/cast: the kernel loads the raw f32 rows directly.
        x2d = input_.reshape(B * T, F_in)
        out2d = _fused_mlp(x2d, self.w1, self.b1, self.w2, self.b2,
                           out_dtype=input_.dtype, tm=self.tm)
        return out2d.reshape(B, T, self.out_dim)


# ----------------------------------------------------------------------------
# JAX-side CustomWrapper: mirrors the PyTorch dispatch semantics.
# ----------------------------------------------------------------------------
class CustomWrapper:
    def __init__(self, module, out_dim):
        self.module = module      # callable: input_ -> output
        self.out_dim = out_dim

    def __call__(self, input_, **kwargs):
        # Mirrors CustomWrapper.forward: route through select_inputs if the
        # wrapped module (or its first sub-module) exposes it.
        first = getattr(self.module, "__getitem__", None)
        if first is not None and hasattr(self.module[0], "select_inputs") \
                and callable(self.module[0].select_inputs):
            return self.module(self.module[0].select_inputs(input_, **kwargs))
        if hasattr(self.module, "select_inputs") and callable(self.module.select_inputs):
            return self.module(self.module.select_inputs(input_, **kwargs))
        return self.module(input_)

    def init_hidden(self, batch_size=1):
        # TODO(synk): stateless synthetic module -> nothing to reset.
        pass


# ----------------------------------------------------------------------------
# Demo / smoke test
# ----------------------------------------------------------------------------
if __name__ == "__main__":
    B, T, F_IN, HIDDEN, F_OUT = 2, 24, 16, 32, 16   # M = 48 -> 2-step grid + row padding

    key = jax.random.PRNGKey(0)
    k_x, k_w1, k_b1, k_w2, k_b2 = jax.random.split(key, 5)

    x = jax.random.normal(k_x, (B, T, F_IN), dtype=jnp.float32)

    # Deterministic synthetic parameters (Linear weights stored as [in, out]).
    w1 = jax.random.normal(k_w1, (F_IN, HIDDEN), dtype=jnp.float32) * 0.1
    b1 = jax.random.normal(k_b1, (1, HIDDEN), dtype=jnp.float32) * 0.1
    w2 = jax.random.normal(k_w2, (HIDDEN, F_OUT), dtype=jnp.float32) * 0.1
    b2 = jax.random.normal(k_b2, (1, F_OUT), dtype=jnp.float32) * 0.1

    module = SyntheticMLPModule(w1, b1, w2, b2)          # default tm; >=2-step split kicks in
    wrapper = CustomWrapper(module, out_dim=F_OUT)

    out = wrapper(x)
    out = jax.block_until_ready(out)

    # Reference in plain JAX with the same bf16-rounded operands / f32 accumulate.
    xb = x.reshape(B * T, F_IN).astype(jnp.bfloat16).astype(jnp.float32)
    w1b = w1.astype(jnp.bfloat16).astype(jnp.float32)
    w2b = w2.astype(jnp.bfloat16).astype(jnp.float32)
    h_ref = jnp.maximum(
        jnp.dot(xb, w1b, precision=jax.lax.Precision.HIGHEST) + b1, 0.0)
    ref = jnp.dot(h_ref.astype(jnp.bfloat16).astype(jnp.float32), w2b,
                  precision=jax.lax.Precision.HIGHEST) + b2
    ref = ref.reshape(B, T, F_OUT)

    assert out.shape == (B, T, F_OUT)
    assert jnp.allclose(out, ref, atol=1e-2, rtol=1e-2), \
        f"max abs err {jnp.max(jnp.abs(out - ref))}"

    print("KERNEL_OK")
</pallas_src>

<mosaic_0001>
module attributes {stable_mosaic.version = 11 : i64} {
  func.func @_mlp_kernel(%arg0: i32, %arg1: memref<32x16xf32, #tpu.memory_space<vmem>>, %arg2: memref<16x32xbf16, #tpu.memory_space<vmem>>, %arg3: memref<1x32xf32, #tpu.memory_space<vmem>>, %arg4: memref<32x16xbf16, #tpu.memory_space<vmem>>, %arg5: memref<1x16xf32, #tpu.memory_space<vmem>>, %arg6: memref<32x16xf32, #tpu.memory_space<vmem>>) attributes {dimension_semantics = [#tpu.dimension_semantics<parallel>], iteration_bounds = array<i64: 2>, scalar_prefetch = 0 : i64, scratch_operands = 0 : i64, tpu.core_type = #tpu.core_type<tc>, window_params = [{transform_indices = @transform_0, window_bounds = array<i64: 32, 16>}, {pipeline_mode = #tpu.pipeline_mode<synchronous>, transform_indices = @transform_1, window_bounds = array<i64: 16, 32>}, {pipeline_mode = #tpu.pipeline_mode<synchronous>, transform_indices = @transform_2, window_bounds = array<i64: 1, 32>}, {pipeline_mode = #tpu.pipeline_mode<synchronous>, transform_indices = @transform_3, window_bounds = array<i64: 32, 16>}, {pipeline_mode = #tpu.pipeline_mode<synchronous>, transform_indices = @transform_4, window_bounds = array<i64: 1, 16>}, {transform_indices = @transform_5, window_bounds = array<i64: 32, 16>}]} {
    %c0 = arith.constant 0 : index
    %c0_0 = arith.constant 0 : index
    %0 = vector.load %arg1[%c0, %c0_0] : memref<32x16xf32, #tpu.memory_space<vmem>>, vector<32x16xf32>
    %1 = arith.truncf %0 : vector<32x16xf32> to vector<32x16xbf16>
    %c0_1 = arith.constant 0 : index
    %c0_2 = arith.constant 0 : index
    %2 = vector.load %arg2[%c0_1, %c0_2] : memref<16x32xbf16, #tpu.memory_space<vmem>>, vector<16x32xbf16>
    %cst = arith.constant dense<0.000000e+00> : vector<32x32xf32>
    %3 = tpu.matmul %1, %2, %cst {dimension_numbers = #tpu.dot_dimension_numbers<[1], [0], [0], [1], [0, 0, 1, 1], [], []>} : vector<32x16xbf16>, vector<16x32xbf16>, vector<32x32xf32> -> vector<32x32xf32>
    %c0_3 = arith.constant 0 : index
    %c0_4 = arith.constant 0 : index
    %4 = vector.load %arg3[%c0_3, %c0_4] : memref<1x32xf32, #tpu.memory_space<vmem>>, vector<1x32xf32>
    %5 = vector.broadcast %4 : vector<1x32xf32> to vector<32x32xf32>
    %6 = arith.addf %3, %5 : vector<32x32xf32>
    %cst_5 = arith.constant 0.000000e+00 : f32
    %7 = vector.broadcast %cst_5 : f32 to vector<32x32xf32>
    %8 = arith.maximumf %6, %7 : vector<32x32xf32>
    %9 = arith.truncf %8 : vector<32x32xf32> to vector<32x32xbf16>
    %c0_6 = arith.constant 0 : index
    %c0_7 = arith.constant 0 : index
    %10 = vector.load %arg4[%c0_6, %c0_7] : memref<32x16xbf16, #tpu.memory_space<vmem>>, vector<32x16xbf16>
    %cst_8 = arith.constant dense<0.000000e+00> : vector<32x16xf32>
    %11 = tpu.matmul %9, %10, %cst_8 {dimension_numbers = #tpu.dot_dimension_numbers<[1], [0], [0], [1], [0, 0, 1, 1], [], []>} : vector<32x32xbf16>, vector<32x16xbf16>, vector<32x16xf32> -> vector<32x16xf32>
    %c0_9 = arith.constant 0 : index
    %c0_10 = arith.constant 0 : index
    %12 = vector.load %arg5[%c0_9, %c0_10] : memref<1x16xf32, #tpu.memory_space<vmem>>, vector<1x16xf32>
    %13 = vector.broadcast %12 : vector<1x16xf32> to vector<32x16xf32>
    %14 = arith.addf %11, %13 : vector<32x16xf32>
    %c0_11 = arith.constant 0 : index
    %c0_12 = arith.constant 0 : index
    %15 = vector.load %arg6[%c0_11, %c0_12] : memref<32x16xf32, #tpu.memory_space<vmem>>, vector<32x16xf32>
    tpu.vector_store %arg6[%c0_11, %c0_12], %14 {strides = array<i32>} : memref<32x16xf32, #tpu.memory_space<vmem>>, vector<32x16xf32>,
    return
  }
  func.func @transform_0(%arg0: i32) -> (i32, i32) {
    %c0_i32 = arith.constant 0 : i32
    %c0_i32_0 = arith.constant 0 : i32
    return %arg0, %c0_i32 : i32, i32
  }
  func.func @transform_1(%arg0: i32) -> (i32, i32) {
    %c0_i32 = arith.constant 0 : i32
    %c0_i32_0 = arith.constant 0 : i32
    %c0_i32_1 = arith.constant 0 : i32
    return %c0_i32, %c0_i32_0 : i32, i32
  }
  func.func @transform_2(%arg0: i32) -> (i32, i32) {
    %c0_i32 = arith.constant 0 : i32
    %c0_i32_0 = arith.constant 0 : i32
    %c0_i32_1 = arith.constant 0 : i32
    return %c0_i32, %c0_i32_0 : i32, i32
  }
  func.func @transform_3(%arg0: i32) -> (i32, i32) {
    %c0_i32 = arith.constant 0 : i32
    %c0_i32_0 = arith.constant 0 : i32
    %c0_i32_1 = arith.constant 0 : i32
    return %c0_i32, %c0_i32_0 : i32, i32
  }
  func.func @transform_4(%arg0: i32) -> (i32, i32) {
    %c0_i32 = arith.constant 0 : i32
    %c0_i32_0 = arith.constant 0 : i32
    %c0_i32_1 = arith.constant 0 : i32
    return %c0_i32, %c0_i32_0 : i32, i32
  }
  func.func @transform_5(%arg0: i32) -> (i32, i32) {
    %c0_i32 = arith.constant 0 : i32
    %c0_i32_0 = arith.constant 0 : i32
    return %arg0, %c0_i32 : i32, i32
  }
}

module attributes {stable_mosaic.version = 11 : i64} {
  func.func @_mlp_kernel(%arg0: i32, %arg1: memref<32x16xf32, #tpu.memory_space<vmem>>, %arg2: memref<16x32xbf16, #tpu.memory_space<vmem>>, %arg3: memref<1x32xf32, #tpu.memory_space<vmem>>, %arg4: memref<32x16xbf16, #tpu.memory_space<vmem>>, %arg5: memref<1x16xf32, #tpu.memory_space<vmem>>, %arg6: memref<32x16xf32, #tpu.memory_space<vmem>>) attributes {dimension_semantics = [#tpu.dimension_semantics<parallel>], iteration_bounds = array<i64: 2>, scalar_prefetch = 0 : i64, scratch_operands = 0 : i64, tpu.core_type = #tpu.core_type<tc>, window_params = [{transform_indices = @transform_0, window_bounds = array<i64: 32, 16>}, {pipeline_mode = #tpu.pipeline_mode<synchronous>, transform_indices = @transform_1, window_bounds = array<i64: 16, 32>}, {pipeline_mode = #tpu.pipeline_mode<synchronous>, transform_indices = @transform_2, window_bounds = array<i64: 1, 32>}, {pipeline_mode = #tpu.pipeline_mode<synchronous>, transform_indices = @transform_3, window_bounds = array<i64: 32, 16>}, {pipeline_mode = #tpu.pipeline_mode<synchronous>, transform_indices = @transform_4, window_bounds = array<i64: 1, 16>}, {transform_indices = @transform_5, window_bounds = array<i64: 32, 16>}]} {
    %c0 = arith.constant 0 : index
    %c0_0 = arith.constant 0 : index
    %0 = vector.load %arg1[%c0, %c0_0] : memref<32x16xf32, #tpu.memory_space<vmem>>, vector<32x16xf32>
    %1 = arith.truncf %0 : vector<32x16xf32> to vector<32x16xbf16>
    %c0_1 = arith.constant 0 : index
    %c0_2 = arith.constant 0 : index
    %2 = vector.load %arg2[%c0_1, %c0_2] : memref<16x32xbf16, #tpu.memory_space<vmem>>, vector<16x32xbf16>
    %cst = arith.constant dense<0.000000e+00> : vector<32x32xf32>
    %3 = tpu.matmul %1, %2, %cst {dimension_numbers = #tpu.dot_dimension_numbers<[1], [0], [0], [1], [0, 0, 1, 1], [], []>} : vector<32x16xbf16>, vector<16x32xbf16>, vector<32x32xf32> -> vector<32x32xf32>
    %c0_3 = arith.constant 0 : index
    %c0_4 = arith.constant 0 : index
    %4 = vector.load %arg3[%c0_3, %c0_4] : memref<1x32xf32, #tpu.memory_space<vmem>>, vector<1x32xf32>
    %5 = vector.broadcast %4 : vector<1x32xf32> to vector<32x32xf32>
    %6 = arith.addf %3, %5 : vector<32x32xf32>
    %cst_5 = arith.constant 0.000000e+00 : f32
    %7 = vector.broadcast %cst_5 : f32 to vector<32x32xf32>
    %8 = arith.maximumf %6, %7 : vector<32x32xf32>
    %9 = arith.truncf %8 : vector<32x32xf32> to vector<32x32xbf16>
    %c0_6 = arith.constant 0 : index
    %c0_7 = arith.constant 0 : index
    %10 = vector.load %arg4[%c0_6, %c0_7] : memref<32x16xbf16, #tpu.memory_space<vmem>>, vector<32x16xbf16>
    %cst_8 = arith.constant dense<0.000000e+00> : vector<32x16xf32>
    %11 = tpu.matmul %9, %10, %cst_8 {dimension_numbers = #tpu.dot_dimension_numbers<[1], [0], [0], [1], [0, 0, 1, 1], [], []>} : vector<32x32xbf16>, vector<32x16xbf16>, vector<32x16xf32> -> vector<32x16xf32>
    %c0_9 = arith.constant 0 : index
    %c0_10 = arith.constant 0 : index
    %12 = vector.load %arg5[%c0_9, %c0_10] : memref<1x16xf32, #tpu.memory_space<vmem>>, vector<1x16xf32>
    %13 = vector.broadcast %12 : vector<1x16xf32> to vector<32x16xf32>
    %14 = arith.addf %11, %13 : vector<32x16xf32>
    %c0_11 = arith.constant 0 : index
    %c0_12 = arith.constant 0 : index
    %15 = vector.load %arg6[%c0_11, %c0_12] : memref<32x16xf32, #tpu.memory_space<vmem>>, vector<32x16xf32>
    tpu.vector_store %arg6[%c0_11, %c0_12], %14 {strides = array<i32>} : memref<32x16xf32, #tpu.memory_space<vmem>>, vector<32x16xf32>,
    return
  }
  func.func @transform_0(%arg0: i32) -> (i32, i32) {
    %c0_i32 = arith.constant 0 : i32
    %c0_i32_0 = arith.constant 0 : i32
    return %arg0, %c0_i32 : i32, i32
  }
  func.func @transform_1(%arg0: i32) -> (i32, i32) {
    %c0_i32 = arith.constant 0 : i32
    %c0_i32_0 = arith.constant 0 : i32
    %c0_i32_1 = arith.constant 0 : i32
    return %c0_i32, %c0_i32_0 : i32, i32
  }
  func.func @transform_2(%arg0: i32) -> (i32, i32) {
    %c0_i32 = arith.constant 0 : i32
    %c0_i32_0 = arith.constant 0 : i32
    %c0_i32_1 = arith.constant 0 : i32
    return %c0_i32, %c0_i32_0 : i32, i32
  }
  func.func @transform_3(%arg0: i32) -> (i32, i32) {
    %c0_i32 = arith.constant 0 : i32
    %c0_i32_0 = arith.constant 0 : i32
    %c0_i32_1 = arith.constant 0 : i32
    return %c0_i32, %c0_i32_0 : i32, i32
  }
  func.func @transform_4(%arg0: i32) -> (i32, i32) {
    %c0_i32 = arith.constant 0 : i32
    %c0_i32_0 = arith.constant 0 : i32
    %c0_i32_1 = arith.constant 0 : i32
    return %c0_i32, %c0_i32_0 : i32, i32
  }
  func.func @transform_5(%arg0: i32) -> (i32, i32) {
    %c0_i32 = arith.constant 0 : i32
    %c0_i32_0 = arith.constant 0 : i32
    return %arg0, %c0_i32 : i32, i32
  }
}

</mosaic_0001>

<llo_original>
// kernel: tpu_custom_call.1
$region0: #{tpu_custom_call.1}
  #allocation0 [shape = 'u32[]', space=smem, size = 0x4, offset = 0x4, fixed_abs, tag = 'smem constant byte address 0x4 - core index']
  #allocation1 [shape = 'u32[144,128]{1,0:T(1,128)}', space=vmem, size = 0x12000, scoped, tag = 'internal scratch']
  %s0 = inlined_call_operand.vmem [shape: f32[64,16], index: 0, kind: input, shape index: {}]
  %s1 = inlined_call_operand.vmem [shape: bf16[16,32], index: 1, kind: input, shape index: {}]
  %s2 = inlined_call_operand.vmem [shape: f32[1,32], index: 2, kind: input, shape index: {}]
  %s3 = inlined_call_operand.vmem [shape: bf16[32,16], index: 3, kind: input, shape index: {}]
  %s4 = inlined_call_operand.vmem [shape: f32[1,16], index: 4, kind: input, shape index: {}]
  %s5 = inlined_call_operand.vmem [shape: f32[64,16], index: 5, kind: output, shape index: {}]
  %s6 = sld [smem:[#allocation0]]
  $region53: #{tpu_custom_call.1} parent=0
    _
  %s8 = ssub.s32 1, %s6
  %s9 = scalar_select 0, %s8, %s6
  loop: start=0, step=1, limit=4
  $region2: #{tpu_custom_call.1} parent=0 // loop_pre_header
    _
  $region3: #{tpu_custom_call.1} parent=0 // loop_header
    %s11 = sphi 0, %s15
    %p12 = scmp.ge.s32.totalorder %s11, 4
    %s21 = sphi 0, %s23
    %s24 = sphi 0, %s21
    %s25 = sphi 0, %s24
    %s41 = sphi 0, %s25
    %s45 = sphi 0, %s45
    %s47 = sphi 0, %s45
    %s48 = sphi 0, %s47
    %s62 = sphi 0, %s48
    %s66 = sphi 0, %s66
    %s68 = sphi 0, %s66
    %s69 = sphi 0, %s68
    %s83 = sphi 0, %s69
    %s87 = sphi 0, %s87
    %s89 = sphi 0, %s87
    %s90 = sphi 0, %s89
    %s104 = sphi 0, %s90
    %s108 = sphi 0, %s108
    %s110 = sphi 0, %s108
    %s111 = sphi 0, %s110
    %s125 = sphi 0, %s111
    %s131 = sphi 0, %s133
    %s134 = sphi 0, %s131
    %s135 = sphi 0, %s134
    %s151 = sphi 0, %s135
  $region4: #{tpu_custom_call.1} parent=0 // loop_header_branch
    %14 = sbr.rel (%p12) target = $region8
  $region5: #{tpu_custom_call.1} parent=0 // loop_body
    %s16 = ssub.s32 %s11, 1
    %s17 = ssub.s32 %s11, 2
    %s18 = sadd.s32 %s11, 1
    %s19 = ssub.s32 %s11, %s18
    %p20 = scmp.eq.s32.totalorder %s19, 0
    %s22 = sadd.s32 %s21, 1
    %s23 = scalar_select %p20, %s21, %s22
    %p26 = pneg %p20
    %p27 = scmp.eq.s32.totalorder %s11, 1
    %p28 = por %p26, %p27
    %p29 = scmp.ne.s32.totalorder %s21, %s24
    %p30 = scmp.eq.s32.totalorder %s11, 0
    %p31 = por %p29, %p30
    %p32 = scmp.ne.s32.totalorder %s21, %s24
    %p33 = scmp.eq.s32.totalorder %s16, 1
    %p34 = por %p32, %p33
    %p35 = scmp.ne.s32.totalorder %s24, %s25
    %p36 = scmp.eq.s32.totalorder %s16, 0
    %p37 = por %p35, %p36
    %p38 = scmp.ne.s32.totalorder %s24, %s25
    %p39 = scmp.eq.s32.totalorder %s17, 1
    %p40 = por %p38, %p39
    %p42 = scmp.ne.s32.totalorder %s25, %s41
    %p43 = scmp.eq.s32.totalorder %s17, 0
    %p44 = por %p42, %p43
    %s46 = sadd.s32 %s45, 1
    %p49 = scmp.eq.s32.totalorder %s11, 1
    %p50 = scmp.ne.s32.totalorder %s45, %s47
    %p51 = scmp.eq.s32.totalorder %s11, 0
    %p52 = por %p50, %p51
    %p53 = scmp.ne.s32.totalorder %s45, %s47
    %p54 = scmp.eq.s32.totalorder %s16, 1
    %p55 = por %p53, %p54
    %p56 = scmp.ne.s32.totalorder %s47, %s48
    %p57 = scmp.eq.s32.totalorder %s16, 0
    %p58 = por %p56, %p57
    %p59 = scmp.ne.s32.totalorder %s47, %s48
    %p60 = scmp.eq.s32.totalorder %s17, 1
    %p61 = por %p59, %p60
    %p63 = scmp.ne.s32.totalorder %s48, %s62
    %p64 = scmp.eq.s32.totalorder %s17, 0
    %p65 = por %p63, %p64
    %s67 = sadd.s32 %s66, 1
    %p70 = scmp.eq.s32.totalorder %s11, 1
    %p71 = scmp.ne.s32.totalorder %s66, %s68
    %p72 = scmp.eq.s32.totalorder %s11, 0
    %p73 = por %p71, %p72
    %p74 = scmp.ne.s32.totalorder %s66, %s68
    %p75 = scmp.eq.s32.totalorder %s16, 1
    %p76 = por %p74, %p75
    %p77 = scmp.ne.s32.totalorder %s68, %s69
    %p78 = scmp.eq.s32.totalorder %s16, 0
    %p79 = por %p77, %p78
    %p80 = scmp.ne.s32.totalorder %s68, %s69
    %p81 = scmp.eq.s32.totalorder %s17, 1
    %p82 = por %p80, %p81
    %p84 = scmp.ne.s32.totalorder %s69, %s83
    %p85 = scmp.eq.s32.totalorder %s17, 0
    %p86 = por %p84, %p85
    %s88 = sadd.s32 %s87, 1
    %p91 = scmp.eq.s32.totalorder %s11, 1
    %p92 = scmp.ne.s32.totalorder %s87, %s89
    %p93 = scmp.eq.s32.totalorder %s11, 0
    %p94 = por %p92, %p93
    %p95 = scmp.ne.s32.totalorder %s87, %s89
    %p96 = scmp.eq.s32.totalorder %s16, 1
    %p97 = por %p95, %p96
    %p98 = scmp.ne.s32.totalorder %s89, %s90
    %p99 = scmp.eq.s32.totalorder %s16, 0
    %p100 = por %p98, %p99
    %p101 = scmp.ne.s32.totalorder %s89, %s90
    %p102 = scmp.eq.s32.totalorder %s17, 1
    %p103 = por %p101, %p102
    %p105 = scmp.ne.s32.totalorder %s90, %s104
    %p106 = scmp.eq.s32.totalorder %s17, 0
    %p107 = por %p105, %p106
    %s109 = sadd.s32 %s108, 1
    %p112 = scmp.eq.s32.totalorder %s11, 1
    %p113 = scmp.ne.s32.totalorder %s108, %s110
    %p114 = scmp.eq.s32.totalorder %s11, 0
    %p115 = por %p113, %p114
    %p116 = scmp.ne.s32.totalorder %s108, %s110
    %p117 = scmp.eq.s32.totalorder %s16, 1
    %p118 = por %p116, %p117
    %p119 = scmp.ne.s32.totalorder %s110, %s111
    %p120 = scmp.eq.s32.totalorder %s16, 0
    %p121 = por %p119, %p120
    %p122 = scmp.ne.s32.totalorder %s110, %s111
    %p123 = scmp.eq.s32.totalorder %s17, 1
    %p124 = por %p122, %p123
    %p126 = scmp.ne.s32.totalorder %s111, %s125
    %p127 = scmp.eq.s32.totalorder %s17, 0
    %p128 = por %p126, %p127
    %s129 = ssub.s32 %s11, %s18
    %p130 = scmp.eq.s32.totalorder %s129, 0
    %s132 = sadd.s32 %s131, 1
    %s133 = scalar_select %p130, %s131, %s132
    %p136 = pneg %p130
    %p137 = scmp.eq.s32.totalorder %s11, 1
    %p138 = por %p136, %p137
    %p139 = scmp.ne.s32.totalorder %s131, %s134
    %p140 = scmp.eq.s32.totalorder %s11, 0
    %p141 = por %p139, %p140
    %p142 = scmp.ne.s32.totalorder %s131, %s134
    %p143 = scmp.eq.s32.totalorder %s16, 1
    %p144 = por %p142, %p143
    %p145 = scmp.ne.s32.totalorder %s134, %s135
    %p146 = scmp.eq.s32.totalorder %s16, 0
    %p147 = por %p145, %p146
    %p148 = scmp.ne.s32.totalorder %s134, %s135
    %p149 = scmp.eq.s32.totalorder %s17, 1
    %p150 = por %p148, %p149
    %p152 = scmp.ne.s32.totalorder %s135, %s151
    %p153 = scmp.eq.s32.totalorder %s17, 0
    %p154 = por %p152, %p153
    %p155 = scmp.le.s32.totalorder 1, %s11
    %p156 = scmp.lt.s32.totalorder %s11, 3
    %p157 = pnand %p155, %p156
    %p158 = pneg %p157
    // Predicated region
    $region9: #{tpu_custom_call.1} parent=5 // pred_check
      _
    $region10: #{tpu_custom_call.1} parent=5 // pred_check_branch
      %160 = sbr.rel (%p157) target = $region12
    $region11: #{tpu_custom_call.1} parent=5 // pred_region
      %s161 = ssub.s32 %s11, 1
      // Predicated region
      $region13: #{tpu_custom_call.1} parent=11 // pred_check
        %p162 = pneg %p58
      $region14: #{tpu_custom_call.1} parent=11 // pred_check_branch
        %164 = sbr.rel (%p162) target = $region16
      $region15: #{tpu_custom_call.1} parent=11 // pred_region
        _
      $region16: #{tpu_custom_call.1} parent=11 // pred_fallthru
        _
      // Predicated region
      $region17: #{tpu_custom_call.1} parent=11 // pred_check
        %p165 = pneg %p79
      $region18: #{tpu_custom_call.1} parent=11 // pred_check_branch
        %167 = sbr.rel (%p165) target = $region20
      $region19: #{tpu_custom_call.1} parent=11 // pred_region
        _
      $region20: #{tpu_custom_call.1} parent=11 // pred_fallthru
        _
      // Predicated region
      $region21: #{tpu_custom_call.1} parent=11 // pred_check
        %p168 = pneg %p100
      $region22: #{tpu_custom_call.1} parent=11 // pred_check_branch
        %170 = sbr.rel (%p168) target = $region24
      $region23: #{tpu_custom_call.1} parent=11 // pred_region
        _
      $region24: #{tpu_custom_call.1} parent=11 // pred_fallthru
        _
      // Predicated region
      $region25: #{tpu_custom_call.1} parent=11 // pred_check
        %p171 = pneg %p121
      $region26: #{tpu_custom_call.1} parent=11 // pred_check_branch
        %173 = sbr.rel (%p171) target = $region28
      $region27: #{tpu_custom_call.1} parent=11 // pred_region
        _
      $region28: #{tpu_custom_call.1} parent=11 // pred_fallthru
        _
    $region12: #{tpu_custom_call.1} parent=5 // pred_fallthru
      _
    %p174 = scmp.lt.s32.totalorder %s11, 2
    // Predicated region
    $region29: #{tpu_custom_call.1} parent=5 // pred_check
      %p175 = pneg %p174
    $region30: #{tpu_custom_call.1} parent=5 // pred_check_branch
      %177 = sbr.rel (%p175) target = $region32
    $region31: #{tpu_custom_call.1} parent=5 // pred_region
      // Predicated region
      $region33: #{tpu_custom_call.1} parent=31 // pred_check
        %p178 = pneg %p31
      $region34: #{tpu_custom_call.1} parent=31 // pred_check_branch
        %180 = sbr.rel (%p178) target = $region36
      $region35: #{tpu_custom_call.1} parent=31 // pred_region
        %s181 = smul.u32 4, %s11
        %p182 = scmp.lt.s32.totalorder %s181, 7
        %s183 = scalar_select %p182, %s181, 7
        %s184 = smul.addr %s183, 8
        %s185 = scalar_lea.vmem %s0, %s184
        %s186 = smul.u32 4, %s11
      $region36: #{tpu_custom_call.1} parent=31 // pred_fallthru
        _
    $region32: #{tpu_custom_call.1} parent=5 // pred_fallthru
      _
    %p187 = scmp.le.s32.totalorder 1, %s11
    %p188 = scmp.lt.s32.totalorder %s11, 3
    %p189 = pnand %p187, %p188
    %p190 = pneg %p189
    // Predicated region
    $region37: #{tpu_custom_call.1} parent=5 // pred_check
      _
    $region38: #{tpu_custom_call.1} parent=5 // pred_check_branch
      %192 = sbr.rel (%p189) target = $region40
    $region39: #{tpu_custom_call.1} parent=5 // pred_region
      %s193 = ssub.s32 %s11, 1
      %s194 = smul.u32 4, %s16
      %p195 = scmp.lt.s32.totalorder %s194, 7
      %s196 = scalar_select %p195, %s194, 7
      %s197 = smul.addr %s196, 8
      %s198 = scalar_lea.vmem %s0, %s197
      %p199 = pneg %p37
      %p200 = pneg %p34
      %p201 = pneg %p58
      %p202 = pneg %p55
      %p203 = pneg %p79
      %p204 = pneg %p76
      %p205 = pneg %p100
      %p206 = pneg %p97
      %p207 = pneg %p121
      %p208 = pneg %p118
      %p209 = pneg %p147
      %p210 = pneg %p144
      %s211 = smul.u32 4, %s16
      %p212 = scmp.lt.s32.totalorder %s211, 7
      %s213 = scalar_select %p212, %s211, 7
      %s214 = smul.addr %s213, 8
      %s215 = scalar_lea.vmem %s5, %s214
      %s216 = smul.u32 4, %s16
      %p217 = scmp.lt.s32.totalorder %s216, 7
      %s218 = scalar_select %p217, %s216, 7
      %s219 = smul.addr %s218, 8
      %s220 = scalar_lea.vmem %s0, %s219
      %s221 = smul.u32 4, %s16
      %s222 = smul.u32 4, %s16
      %p223 = scmp.lt.s32.totalorder %s222, 7
      %s224 = scalar_select %p223, %s222, 7
      %s225 = smul.addr %s224, 8
      %s226 = scalar_lea.vmem %s5, %s225
      %s227 = smul.u32 4, %s16
      %v229 = vld [vmem:[%s220] sm:$0xff]
      %v230 = vld [vmem:[%s220 + $0x8] sm:$0xff]
      %v231 = vld [vmem:[%s220 + $0x10] sm:$0xff]
      %v232 = vld [vmem:[%s220 + $0x18] sm:$0xff]
      %v233 = vpack.c.bf16 %v230, %v229
      %v234 = vpack.c.bf16 %v232, %v231
      %v235 = vld [vmem:[%s1] sm:$0xf]
      %v236 = vld [vmem:[%s1 + $0x4] sm:$0xf]
      %v237 = vld [vmem:[%s2] sm:$0x1]
      %v239 = vlaneseq
      %v240 = vshrl.u32 %v239, 7
      %v241 = vsub.s32 0, %v240
      %v242 = vrot.slane %v237, %v241
      %v246 = vunpack.c.l.b16 %v235
      %v247 = vunpack.c.l.b16 %v236
      %v248 = vpack.c.b16 %v247, %v246
      %vm250 = vcmask 130048
      %v252 = vsel %vm250, %v233, 0
      %v255 = vsel %vm250, %v234, 0
      %257 = vmatprep.subr.bf16.mxu0 0
      %258 = vmatpush1.bf16.msra.mxu0 %v248
      %259 = vmatprep.subr.bf16.mxu0 0
      %260 = vmatpush1.bf16.msra.mxu0 0
      %261 = vmatprep.subr.bf16.mxu0 0
      %262 = vmatpush1.bf16.msra.mxu0 0
      %263 = vmatprep.subr.bf16.mxu0 0
      %264 = vmatpush1.bf16.msra.mxu0 0
      %265 = vmatprep.subr.bf16.mxu0 0
      %266 = vmatpush1.bf16.msra.mxu0 0
      %267 = vmatprep.subr.bf16.mxu0 0
      %268 = vmatpush1.bf16.msra.mxu0 0
      %269 = vmatprep.subr.bf16.mxu0 0
      %270 = vmatpush1.bf16.msra.mxu0 0
      %271 = vmatprep.subr.bf16.mxu0 0
      %272 = vmatpush1.bf16.msra.mxu0 0
      %273 = vmatprep.subr.bf16.mxu0 0
      %274 = vmatpush1.bf16.msra.mxu0 0
      %275 = vmatprep.subr.bf16.mxu0 0
      %276 = vmatpush1.bf16.msra.mxu0 0
      %277 = vmatprep.subr.bf16.mxu0 0
      %278 = vmatpush1.bf16.msra.mxu0 0
      %279 = vmatprep.subr.bf16.mxu0 0
      %280 = vmatpush1.bf16.msra.mxu0 0
      %281 = vmatprep.subr.bf16.mxu0 0
      %282 = vmatpush1.bf16.msra.mxu0 0
      %283 = vmatprep.subr.bf16.mxu0 0
      %284 = vmatpush1.bf16.msra.mxu0 0
      %285 = vmatprep.subr.bf16.mxu0 0
      %286 = vmatpush1.bf16.msra.mxu0 0
      %287 = vmatprep.subr.bf16.mxu0 0
      %288 = vmatpush1.bf16.msra.mxu0 0
      %289 = vmatprep.mubr.bf16.mxu0 0
      %290 = vmatmul.mubr.bf16.gmra.mrb[0].mxu0 %v252
      %v291 = vpop.f32.mrb[0].mxu0
      %v292 = vadd.f32 %v242, %v291
      %v293 = vpop.f32.mrb[0].mxu0
      %v294 = vpop.f32.mrb[0].mxu0
      %v295 = vadd.f32 %v242, %v294
      %v296 = vpop.f32.mrb[0].mxu0
      %297 = vmatprep.mubr.bf16.mxu0 0
      %298 = vmatmul.mubr.bf16.gmra.mrb[0].mxu0 %v255
      %v299 = vpop.f32.mrb[0].mxu0
      %v300 = vadd.f32 %v242, %v299
      %v301 = vpop.f32.mrb[0].mxu0
      %v302 = vpop.f32.mrb[0].mxu0
      %v303 = vadd.f32 %v242, %v302
      %v304 = vpop.f32.mrb[0].mxu0
      %305 = vdwg.mxu0
      %v306 = vmax.f32 %v292, 0.0
      %v307 = vmax.f32 %v295, 0.0
      %v308 = vmax.f32 %v300, 0.0
      %v309 = vmax.f32 %v303, 0.0
      %v310 = vpack.c.bf16 %v307, %v306
      %v311 = vpack.c.bf16 %v309, %v308
      %v312 = vld [vmem:[%s3] sm:$0xf]
      %v313 = vld [vmem:[%s3 + $0x4] sm:$0xf]
      %v314 = vld [vmem:[%s3 + $0x8] sm:$0xf]
      %v315 = vld [vmem:[%s3 + $0xc] sm:$0xf]
      %v316 = vld [vmem:[%s4] sm:$0x1]
      %v318 = vlaneseq
      %v319 = vshrl.u32 %v318, 7
      %v320 = vsub.s32 0, %v319
      %v321 = vrot.slane %v316, %v320
      %v327 = vunpack.c.l.b16 %v312
      %v328 = vunpack.c.l.b16 %v313
      %v329 = vunpack.c.l.b16 %v314
      %v330 = vunpack.c.l.b16 %v315
      %v331 = vpack.c.b16 %v328, %v327
      %v332 = vpack.c.b16 %v330, %v329
      %vm335 = vcmask 261120
      %v337 = vsel %vm335, %v310, 0
      %v340 = vsel %vm335, %v311, 0
      %342 = vmatprep.subr.bf16.mxu0 0
      %343 = vmatpush1.bf16.msra.mxu0 %v331
      %344 = vmatprep.subr.bf16.mxu0 0
      %345 = vmatpush1.bf16.msra.mxu0 %v332
      %346 = vmatprep.subr.bf16.mxu0 0
      %347 = vmatpush1.bf16.msra.mxu0 0
      %348 = vmatprep.subr.bf16.mxu0 0
      %349 = vmatpush1.bf16.msra.mxu0 0
      %350 = vmatprep.subr.bf16.mxu0 0
      %351 = vmatpush1.bf16.msra.mxu0 0
      %352 = vmatprep.subr.bf16.mxu0 0
      %353 = vmatpush1.bf16.msra.mxu0 0
      %354 = vmatprep.subr.bf16.mxu0 0
      %355 = vmatpush1.bf16.msra.mxu0 0
      %356 = vmatprep.subr.bf16.mxu0 0
      %357 = vmatpush1.bf16.msra.mxu0 0
      %358 = vmatprep.subr.bf16.mxu0 0
      %359 = vmatpush1.bf16.msra.mxu0 0
      %360 = vmatprep.subr.bf16.mxu0 0
      %361 = vmatpush1.bf16.msra.mxu0 0
      %362 = vmatprep.subr.bf16.mxu0 0
      %363 = vmatpush1.bf16.msra.mxu0 0
      %364 = vmatprep.subr.bf16.mxu0 0
      %365 = vmatpush1.bf16.msra.mxu0 0
      %366 = vmatprep.subr.bf16.mxu0 0
      %367 = vmatpush1.bf16.msra.mxu0 0
      %368 = vmatprep.subr.bf16.mxu0 0
      %369 = vmatpush1.bf16.msra.mxu0 0
      %370 = vmatprep.subr.bf16.mxu0 0
      %371 = vmatpush1.bf16.msra.mxu0 0
      %372 = vmatprep.subr.bf16.mxu0 0
      %373 = vmatpush1.bf16.msra.mxu0 0
      %374 = vmatprep.mubr.bf16.mxu0 0
      %375 = vmatmul.mubr.bf16.gmra.mrb[0].mxu0 %v337
      %v376 = vpop.f32.mrb[0].mxu0
      %v377 = vadd.f32 %v321, %v376
      %v378 = vpop.f32.mrb[0].mxu0
      %v379 = vpop.f32.mrb[0].mxu0
      %v380 = vadd.f32 %v321, %v379
      %v381 = vpop.f32.mrb[0].mxu0
      %382 = vmatprep.mubr.bf16.mxu0 0
      %383 = vmatmul.mubr.bf16.gmra.mrb[0].mxu0 %v340
      %v384 = vpop.f32.mrb[0].mxu0
      %v385 = vadd.f32 %v321, %v384
      %v386 = vpop.f32.mrb[0].mxu0
      %v387 = vpop.f32.mrb[0].mxu0
      %v388 = vadd.f32 %v321, %v387
      %v389 = vpop.f32.mrb[0].mxu0
      %390 = vdwg.mxu0
      %391 = vst.msk [vmem:[%s226] sm:$0xff] %vm250, %v377
      %392 = vst.msk [vmem:[%s226 + $0x8] sm:$0xff] %vm250, %v380
      %393 = vst.msk [vmem:[%s226 + $0x10] sm:$0xff] %vm250, %v385
      %394 = vst.msk [vmem:[%s226 + $0x18] sm:$0xff] %vm250, %v388
      %s395 = smul.u32 4, %s16
      %p396 = scmp.lt.s32.totalorder %s395, 7
      %s397 = scalar_select %p396, %s395, 7
      %s398 = smul.addr %s397, 8
      %s399 = scalar_lea.vmem %s5, %s398
      // Predicated region
      $region41: #{tpu_custom_call.1} parent=39 // pred_check
        %p400 = pneg %p144
      $region42: #{tpu_custom_call.1} parent=39 // pred_check_branch
        %402 = sbr.rel (%p400) target = $region44
      $region43: #{tpu_custom_call.1} parent=39 // pred_region
        %s403 = smul.u32 4, %s16
      $region44: #{tpu_custom_call.1} parent=39 // pred_fallthru
        _
    $region40: #{tpu_custom_call.1} parent=5 // pred_fallthru
      _
    %p404 = scmp.le.s32.totalorder 2, %s11
    // Predicated region
    $region45: #{tpu_custom_call.1} parent=5 // pred_check
      %p405 = pneg %p404
    $region46: #{tpu_custom_call.1} parent=5 // pred_check_branch
      %407 = sbr.rel (%p405) target = $region48
    $region47: #{tpu_custom_call.1} parent=5 // pred_region
      %s408 = ssub.s32 %s11, 2
      // Predicated region
      $region49: #{tpu_custom_call.1} parent=47 // pred_check
        %p409 = pneg %p150
      $region50: #{tpu_custom_call.1} parent=47 // pred_check_branch
        %411 = sbr.rel (%p409) target = $region52
      $region51: #{tpu_custom_call.1} parent=47 // pred_region
        %s412 = smul.u32 4, %s17
        %p413 = scmp.lt.s32.totalorder %s412, 7
        %s414 = scalar_select %p413, %s412, 7
        %s415 = smul.addr %s414, 8
        %s416 = scalar_lea.vmem %s5, %s415
      $region52: #{tpu_custom_call.1} parent=47 // pred_fallthru
        _
    $region48: #{tpu_custom_call.1} parent=5 // pred_fallthru
      _
  $region6: #{tpu_custom_call.1} parent=0 // loop_footer
    %s15 = sadd.s32 1, %s11
  $region7: #{tpu_custom_call.1} parent=0 // loop_footer_branch
    %10 = sbr.rel target = $region3
  $region8: #{tpu_custom_call.1} parent=0 // loop_exit
    _

// kernel: tpu_custom_call.1
$region0: #{tpu_custom_call.1}
  #allocation0 [shape = 'u32[]', space=smem, size = 0x4, offset = 0x4, fixed_abs, tag = 'smem constant byte address 0x4 - core index']
  #allocation1 [shape = 'u32[144,128]{1,0:T(1,128)}', space=vmem, size = 0x12000, scoped, tag = 'internal scratch']
  %s0 = inlined_call_operand.vmem [shape: f32[64,16], index: 0, kind: input, shape index: {}]
  %s1 = inlined_call_operand.vmem [shape: bf16[16,32], index: 1, kind: input, shape index: {}]
  %s2 = inlined_call_operand.vmem [shape: f32[1,32], index: 2, kind: input, shape index: {}]
  %s3 = inlined_call_operand.vmem [shape: bf16[32,16], index: 3, kind: input, shape index: {}]
  %s4 = inlined_call_operand.vmem [shape: f32[1,16], index: 4, kind: input, shape index: {}]
  %s5 = inlined_call_operand.vmem [shape: f32[64,16], index: 5, kind: output, shape index: {}]
  %s6 = sld [smem:[#allocation0]]
  $region53: #{tpu_custom_call.1} parent=0
    _
  %s8 = ssub.s32 1, %s6
  %s9 = scalar_select 0, %s8, %s6
  loop: start=0, step=1, limit=4
  $region2: #{tpu_custom_call.1} parent=0 // loop_pre_header
    _
  $region3: #{tpu_custom_call.1} parent=0 // loop_header
    %s11 = sphi 0, %s15
    %p12 = scmp.ge.s32.totalorder %s11, 4
    %s21 = sphi 0, %s23
    %s24 = sphi 0, %s21
    %s25 = sphi 0, %s24
    %s41 = sphi 0, %s25
    %s45 = sphi 0, %s45
    %s47 = sphi 0, %s45
    %s48 = sphi 0, %s47
    %s62 = sphi 0, %s48
    %s66 = sphi 0, %s66
    %s68 = sphi 0, %s66
    %s69 = sphi 0, %s68
    %s83 = sphi 0, %s69
    %s87 = sphi 0, %s87
    %s89 = sphi 0, %s87
    %s90 = sphi 0, %s89
    %s104 = sphi 0, %s90
    %s108 = sphi 0, %s108
    %s110 = sphi 0, %s108
    %s111 = sphi 0, %s110
    %s125 = sphi 0, %s111
    %s131 = sphi 0, %s133
    %s134 = sphi 0, %s131
    %s135 = sphi 0, %s134
    %s151 = sphi 0, %s135
  $region4: #{tpu_custom_call.1} parent=0 // loop_header_branch
    %14 = sbr.rel (%p12) target = $region8
  $region5: #{tpu_custom_call.1} parent=0 // loop_body
    %s16 = ssub.s32 %s11, 1
    %s17 = ssub.s32 %s11, 2
    %s18 = sadd.s32 %s11, 1
    %s19 = ssub.s32 %s11, %s18
    %p20 = scmp.eq.s32.totalorder %s19, 0
    %s22 = sadd.s32 %s21, 1
    %s23 = scalar_select %p20, %s21, %s22
    %p26 = pneg %p20
    %p27 = scmp.eq.s32.totalorder %s11, 1
    %p28 = por %p26, %p27
    %p29 = scmp.ne.s32.totalorder %s21, %s24
    %p30 = scmp.eq.s32.totalorder %s11, 0
    %p31 = por %p29, %p30
    %p32 = scmp.ne.s32.totalorder %s21, %s24
    %p33 = scmp.eq.s32.totalorder %s16, 1
    %p34 = por %p32, %p33
    %p35 = scmp.ne.s32.totalorder %s24, %s25
    %p36 = scmp.eq.s32.totalorder %s16, 0
    %p37 = por %p35, %p36
    %p38 = scmp.ne.s32.totalorder %s24, %s25
    %p39 = scmp.eq.s32.totalorder %s17, 1
    %p40 = por %p38, %p39
    %p42 = scmp.ne.s32.totalorder %s25, %s41
    %p43 = scmp.eq.s32.totalorder %s17, 0
    %p44 = por %p42, %p43
    %s46 = sadd.s32 %s45, 1
    %p49 = scmp.eq.s32.totalorder %s11, 1
    %p50 = scmp.ne.s32.totalorder %s45, %s47
    %p51 = scmp.eq.s32.totalorder %s11, 0
    %p52 = por %p50, %p51
    %p53 = scmp.ne.s32.totalorder %s45, %s47
    %p54 = scmp.eq.s32.totalorder %s16, 1
    %p55 = por %p53, %p54
    %p56 = scmp.ne.s32.totalorder %s47, %s48
    %p57 = scmp.eq.s32.totalorder %s16, 0
    %p58 = por %p56, %p57
    %p59 = scmp.ne.s32.totalorder %s47, %s48
    %p60 = scmp.eq.s32.totalorder %s17, 1
    %p61 = por %p59, %p60
    %p63 = scmp.ne.s32.totalorder %s48, %s62
    %p64 = scmp.eq.s32.totalorder %s17, 0
    %p65 = por %p63, %p64
    %s67 = sadd.s32 %s66, 1
    %p70 = scmp.eq.s32.totalorder %s11, 1
    %p71 = scmp.ne.s32.totalorder %s66, %s68
    %p72 = scmp.eq.s32.totalorder %s11, 0
    %p73 = por %p71, %p72
    %p74 = scmp.ne.s32.totalorder %s66, %s68
    %p75 = scmp.eq.s32.totalorder %s16, 1
    %p76 = por %p74, %p75
    %p77 = scmp.ne.s32.totalorder %s68, %s69
    %p78 = scmp.eq.s32.totalorder %s16, 0
    %p79 = por %p77, %p78
    %p80 = scmp.ne.s32.totalorder %s68, %s69
    %p81 = scmp.eq.s32.totalorder %s17, 1
    %p82 = por %p80, %p81
    %p84 = scmp.ne.s32.totalorder %s69, %s83
    %p85 = scmp.eq.s32.totalorder %s17, 0
    %p86 = por %p84, %p85
    %s88 = sadd.s32 %s87, 1
    %p91 = scmp.eq.s32.totalorder %s11, 1
    %p92 = scmp.ne.s32.totalorder %s87, %s89
    %p93 = scmp.eq.s32.totalorder %s11, 0
    %p94 = por %p92, %p93
    %p95 = scmp.ne.s32.totalorder %s87, %s89
    %p96 = scmp.eq.s32.totalorder %s16, 1
    %p97 = por %p95, %p96
    %p98 = scmp.ne.s32.totalorder %s89, %s90
    %p99 = scmp.eq.s32.totalorder %s16, 0
    %p100 = por %p98, %p99
    %p101 = scmp.ne.s32.totalorder %s89, %s90
    %p102 = scmp.eq.s32.totalorder %s17, 1
    %p103 = por %p101, %p102
    %p105 = scmp.ne.s32.totalorder %s90, %s104
    %p106 = scmp.eq.s32.totalorder %s17, 0
    %p107 = por %p105, %p106
    %s109 = sadd.s32 %s108, 1
    %p112 = scmp.eq.s32.totalorder %s11, 1
    %p113 = scmp.ne.s32.totalorder %s108, %s110
    %p114 = scmp.eq.s32.totalorder %s11, 0
    %p115 = por %p113, %p114
    %p116 = scmp.ne.s32.totalorder %s108, %s110
    %p117 = scmp.eq.s32.totalorder %s16, 1
    %p118 = por %p116, %p117
    %p119 = scmp.ne.s32.totalorder %s110, %s111
    %p120 = scmp.eq.s32.totalorder %s16, 0
    %p121 = por %p119, %p120
    %p122 = scmp.ne.s32.totalorder %s110, %s111
    %p123 = scmp.eq.s32.totalorder %s17, 1
    %p124 = por %p122, %p123
    %p126 = scmp.ne.s32.totalorder %s111, %s125
    %p127 = scmp.eq.s32.totalorder %s17, 0
    %p128 = por %p126, %p127
    %s129 = ssub.s32 %s11, %s18
    %p130 = scmp.eq.s32.totalorder %s129, 0
    %s132 = sadd.s32 %s131, 1
    %s133 = scalar_select %p130, %s131, %s132
    %p136 = pneg %p130
    %p137 = scmp.eq.s32.totalorder %s11, 1
    %p138 = por %p136, %p137
    %p139 = scmp.ne.s32.totalorder %s131, %s134
    %p140 = scmp.eq.s32.totalorder %s11, 0
    %p141 = por %p139, %p140
    %p142 = scmp.ne.s32.totalorder %s131, %s134
    %p143 = scmp.eq.s32.totalorder %s16, 1
    %p144 = por %p142, %p143
    %p145 = scmp.ne.s32.totalorder %s134, %s135
    %p146 = scmp.eq.s32.totalorder %s16, 0
    %p147 = por %p145, %p146
    %p148 = scmp.ne.s32.totalorder %s134, %s135
    %p149 = scmp.eq.s32.totalorder %s17, 1
    %p150 = por %p148, %p149
    %p152 = scmp.ne.s32.totalorder %s135, %s151
    %p153 = scmp.eq.s32.totalorder %s17, 0
    %p154 = por %p152, %p153
    %p155 = scmp.le.s32.totalorder 1, %s11
    %p156 = scmp.lt.s32.totalorder %s11, 3
    %p157 = pnand %p155, %p156
    %p158 = pneg %p157
    // Predicated region
    $region9: #{tpu_custom_call.1} parent=5 // pred_check
      _
    $region10: #{tpu_custom_call.1} parent=5 // pred_check_branch
      %160 = sbr.rel (%p157) target = $region12
    $region11: #{tpu_custom_call.1} parent=5 // pred_region
      %s161 = ssub.s32 %s11, 1
      // Predicated region
      $region13: #{tpu_custom_call.1} parent=11 // pred_check
        %p162 = pneg %p58
      $region14: #{tpu_custom_call.1} parent=11 // pred_check_branch
        %164 = sbr.rel (%p162) target = $region16
      $region15: #{tpu_custom_call.1} parent=11 // pred_region
        _
      $region16: #{tpu_custom_call.1} parent=11 // pred_fallthru
        _
      // Predicated region
      $region17: #{tpu_custom_call.1} parent=11 // pred_check
        %p165 = pneg %p79
      $region18: #{tpu_custom_call.1} parent=11 // pred_check_branch
        %167 = sbr.rel (%p165) target = $region20
      $region19: #{tpu_custom_call.1} parent=11 // pred_region
        _
      $region20: #{tpu_custom_call.1} parent=11 // pred_fallthru
        _
      // Predicated region
      $region21: #{tpu_custom_call.1} parent=11 // pred_check
        %p168 = pneg %p100
      $region22: #{tpu_custom_call.1} parent=11 // pred_check_branch
        %170 = sbr.rel (%p168) target = $region24
      $region23: #{tpu_custom_call.1} parent=11 // pred_region
        _
      $region24: #{tpu_custom_call.1} parent=11 // pred_fallthru
        _
      // Predicated region
      $region25: #{tpu_custom_call.1} parent=11 // pred_check
        %p171 = pneg %p121
      $region26: #{tpu_custom_call.1} parent=11 // pred_check_branch
        %173 = sbr.rel (%p171) target = $region28
      $region27: #{tpu_custom_call.1} parent=11 // pred_region
        _
      $region28: #{tpu_custom_call.1} parent=11 // pred_fallthru
        _
    $region12: #{tpu_custom_call.1} parent=5 // pred_fallthru
      _
    %p174 = scmp.lt.s32.totalorder %s11, 2
    // Predicated region
    $region29: #{tpu_custom_call.1} parent=5 // pred_check
      %p175 = pneg %p174
    $region30: #{tpu_custom_call.1} parent=5 // pred_check_branch
      %177 = sbr.rel (%p175) target = $region32
    $region31: #{tpu_custom_call.1} parent=5 // pred_region
      // Predicated region
      $region33: #{tpu_custom_call.1} parent=31 // pred_check
        %p178 = pneg %p31
      $region34: #{tpu_custom_call.1} parent=31 // pred_check_branch
        %180 = sbr.rel (%p178) target = $region36
      $region35: #{tpu_custom_call.1} parent=31 // pred_region
        %s181 = smul.u32 4, %s11
        %p182 = scmp.lt.s32.totalorder %s181, 7
        %s183 = scalar_select %p182, %s181, 7
        %s184 = smul.addr %s183, 8
        %s185 = scalar_lea.vmem %s0, %s184
        %s186 = smul.u32 4, %s11
      $region36: #{tpu_custom_call.1} parent=31 // pred_fallthru
        _
    $region32: #{tpu_custom_call.1} parent=5 // pred_fallthru
      _
    %p187 = scmp.le.s32.totalorder 1, %s11
    %p188 = scmp.lt.s32.totalorder %s11, 3
    %p189 = pnand %p187, %p188
    %p190 = pneg %p189
    // Predicated region
    $region37: #{tpu_custom_call.1} parent=5 // pred_check
      _
    $region38: #{tpu_custom_call.1} parent=5 // pred_check_branch
      %192 = sbr.rel (%p189) target = $region40
    $region39: #{tpu_custom_call.1} parent=5 // pred_region
      %s193 = ssub.s32 %s11, 1
      %s194 = smul.u32 4, %s16
      %p195 = scmp.lt.s32.totalorder %s194, 7
      %s196 = scalar_select %p195, %s194, 7
      %s197 = smul.addr %s196, 8
      %s198 = scalar_lea.vmem %s0, %s197
      %p199 = pneg %p37
      %p200 = pneg %p34
      %p201 = pneg %p58
      %p202 = pneg %p55
      %p203 = pneg %p79
      %p204 = pneg %p76
      %p205 = pneg %p100
      %p206 = pneg %p97
      %p207 = pneg %p121
      %p208 = pneg %p118
      %p209 = pneg %p147
      %p210 = pneg %p144
      %s211 = smul.u32 4, %s16
      %p212 = scmp.lt.s32.totalorder %s211, 7
      %s213 = scalar_select %p212, %s211, 7
      %s214 = smul.addr %s213, 8
      %s215 = scalar_lea.vmem %s5, %s214
      %s216 = smul.u32 4, %s16
      %p217 = scmp.lt.s32.totalorder %s216, 7
      %s218 = scalar_select %p217, %s216, 7
      %s219 = smul.addr %s218, 8
      %s220 = scalar_lea.vmem %s0, %s219
      %s221 = smul.u32 4, %s16
      %s222 = smul.u32 4, %s16
      %p223 = scmp.lt.s32.totalorder %s222, 7
      %s224 = scalar_select %p223, %s222, 7
      %s225 = smul.addr %s224, 8
      %s226 = scalar_lea.vmem %s5, %s225
      %s227 = smul.u32 4, %s16
      %v229 = vld [vmem:[%s220] sm:$0xff]
      %v230 = vld [vmem:[%s220 + $0x8] sm:$0xff]
      %v231 = vld [vmem:[%s220 + $0x10] sm:$0xff]
      %v232 = vld [vmem:[%s220 + $0x18] sm:$0xff]
      %v233 = vpack.c.bf16 %v230, %v229
      %v234 = vpack.c.bf16 %v232, %v231
      %v235 = vld [vmem:[%s1] sm:$0xf]
      %v236 = vld [vmem:[%s1 + $0x4] sm:$0xf]
      %v237 = vld [vmem:[%s2] sm:$0x1]
      %v239 = vlaneseq
      %v240 = vshrl.u32 %v239, 7
      %v241 = vsub.s32 0, %v240
      %v242 = vrot.slane %v237, %v241
      %v246 = vunpack.c.l.b16 %v235
      %v247 = vunpack.c.l.b16 %v236
      %v248 = vpack.c.b16 %v247, %v246
      %vm250 = vcmask 130048
      %v252 = vsel %vm250, %v233, 0
      %v255 = vsel %vm250, %v234, 0
      %257 = vmatprep.subr.bf16.mxu0 0
      %258 = vmatpush1.bf16.msra.mxu0 %v248
      %259 = vmatprep.subr.bf16.mxu0 0
      %260 = vmatpush1.bf16.msra.mxu0 0
      %261 = vmatprep.subr.bf16.mxu0 0
      %262 = vmatpush1.bf16.msra.mxu0 0
      %263 = vmatprep.subr.bf16.mxu0 0
      %264 = vmatpush1.bf16.msra.mxu0 0
      %265 = vmatprep.subr.bf16.mxu0 0
      %266 = vmatpush1.bf16.msra.mxu0 0
      %267 = vmatprep.subr.bf16.mxu0 0
      %268 = vmatpush1.bf16.msra.mxu0 0
      %269 = vmatprep.subr.bf16.mxu0 0
      %270 = vmatpush1.bf16.msra.mxu0 0
      %271 = vmatprep.subr.bf16.mxu0 0
      %272 = vmatpush1.bf16.msra.mxu0 0
      %273 = vmatprep.subr.bf16.mxu0 0
      %274 = vmatpush1.bf16.msra.mxu0 0
      %275 = vmatprep.subr.bf16.mxu0 0
      %276 = vmatpush1.bf16.msra.mxu0 0
      %277 = vmatprep.subr.bf16.mxu0 0
      %278 = vmatpush1.bf16.msra.mxu0 0
      %279 = vmatprep.subr.bf16.mxu0 0
      %280 = vmatpush1.bf16.msra.mxu0 0
      %281 = vmatprep.subr.bf16.mxu0 0
      %282 = vmatpush1.bf16.msra.mxu0 0
      %283 = vmatprep.subr.bf16.mxu0 0
      %284 = vmatpush1.bf16.msra.mxu0 0
      %285 = vmatprep.subr.bf16.mxu0 0
      %286 = vmatpush1.bf16.msra.mxu0 0
      %287 = vmatprep.subr.bf16.mxu0 0
      %288 = vmatpush1.bf16.msra.mxu0 0
      %289 = vmatprep.mubr.bf16.mxu0 0
      %290 = vmatmul.mubr.bf16.gmra.mrb[0].mxu0 %v252
      %v291 = vpop.f32.mrb[0].mxu0
      %v292 = vadd.f32 %v242, %v291
      %v293 = vpop.f32.mrb[0].mxu0
      %v294 = vpop.f32.mrb[0].mxu0
      %v295 = vadd.f32 %v242, %v294
      %v296 = vpop.f32.mrb[0].mxu0
      %297 = vmatprep.mubr.bf16.mxu0 0
      %298 = vmatmul.mubr.bf16.gmra.mrb[0].mxu0 %v255
      %v299 = vpop.f32.mrb[0].mxu0
      %v300 = vadd.f32 %v242, %v299
      %v301 = vpop.f32.mrb[0].mxu0
      %v302 = vpop.f32.mrb[0].mxu0
      %v303 = vadd.f32 %v242, %v302
      %v304 = vpop.f32.mrb[0].mxu0
      %305 = vdwg.mxu0
      %v306 = vmax.f32 %v292, 0.0
      %v307 = vmax.f32 %v295, 0.0
      %v308 = vmax.f32 %v300, 0.0
      %v309 = vmax.f32 %v303, 0.0
      %v310 = vpack.c.bf16 %v307, %v306
      %v311 = vpack.c.bf16 %v309, %v308
      %v312 = vld [vmem:[%s3] sm:$0xf]
      %v313 = vld [vmem:[%s3 + $0x4] sm:$0xf]
      %v314 = vld [vmem:[%s3 + $0x8] sm:$0xf]
      %v315 = vld [vmem:[%s3 + $0xc] sm:$0xf]
      %v316 = vld [vmem:[%s4] sm:$0x1]
      %v318 = vlaneseq
      %v319 = vshrl.u32 %v318, 7
      %v320 = vsub.s32 0, %v319
      %v321 = vrot.slane %v316, %v320
      %v327 = vunpack.c.l.b16 %v312
      %v328 = vunpack.c.l.b16 %v313
      %v329 = vunpack.c.l.b16 %v314
      %v330 = vunpack.c.l.b16 %v315
      %v331 = vpack.c.b16 %v328, %v327
      %v332 = vpack.c.b16 %v330, %v329
      %vm335 = vcmask 261120
      %v337 = vsel %vm335, %v310, 0
      %v340 = vsel %vm335, %v311, 0
      %342 = vmatprep.subr.bf16.mxu0 0
      %343 = vmatpush1.bf16.msra.mxu0 %v331
      %344 = vmatprep.subr.bf16.mxu0 0
      %345 = vmatpush1.bf16.msra.mxu0 %v332
      %346 = vmatprep.subr.bf16.mxu0 0
      %347 = vmatpush1.bf16.msra.mxu0 0
      %348 = vmatprep.subr.bf16.mxu0 0
      %349 = vmatpush1.bf16.msra.mxu0 0
      %350 = vmatprep.subr.bf16.mxu0 0
      %351 = vmatpush1.bf16.msra.mxu0 0
      %352 = vmatprep.subr.bf16.mxu0 0
      %353 = vmatpush1.bf16.msra.mxu0 0
      %354 = vmatprep.subr.bf16.mxu0 0
      %355 = vmatpush1.bf16.msra.mxu0 0
      %356 = vmatprep.subr.bf16.mxu0 0
      %357 = vmatpush1.bf16.msra.mxu0 0
      %358 = vmatprep.subr.bf16.mxu0 0
      %359 = vmatpush1.bf16.msra.mxu0 0
      %360 = vmatprep.subr.bf16.mxu0 0
      %361 = vmatpush1.bf16.msra.mxu0 0
      %362 = vmatprep.subr.bf16.mxu0 0
      %363 = vmatpush1.bf16.msra.mxu0 0
      %364 = vmatprep.subr.bf16.mxu0 0
      %365 = vmatpush1.bf16.msra.mxu0 0
      %366 = vmatprep.subr.bf16.mxu0 0
      %367 = vmatpush1.bf16.msra.mxu0 0
      %368 = vmatprep.subr.bf16.mxu0 0
      %369 = vmatpush1.bf16.msra.mxu0 0
      %370 = vmatprep.subr.bf16.mxu0 0
      %371 = vmatpush1.bf16.msra.mxu0 0
      %372 = vmatprep.subr.bf16.mxu0 0
      %373 = vmatpush1.bf16.msra.mxu0 0
      %374 = vmatprep.mubr.bf16.mxu0 0
      %375 = vmatmul.mubr.bf16.gmra.mrb[0].mxu0 %v337
      %v376 = vpop.f32.mrb[0].mxu0
      %v377 = vadd.f32 %v321, %v376
      %v378 = vpop.f32.mrb[0].mxu0
      %v379 = vpop.f32.mrb[0].mxu0
      %v380 = vadd.f32 %v321, %v379
      %v381 = vpop.f32.mrb[0].mxu0
      %382 = vmatprep.mubr.bf16.mxu0 0
      %383 = vmatmul.mubr.bf16.gmra.mrb[0].mxu0 %v340
      %v384 = vpop.f32.mrb[0].mxu0
      %v385 = vadd.f32 %v321, %v384
      %v386 = vpop.f32.mrb[0].mxu0
      %v387 = vpop.f32.mrb[0].mxu0
      %v388 = vadd.f32 %v321, %v387
      %v389 = vpop.f32.mrb[0].mxu0
      %390 = vdwg.mxu0
      %391 = vst.msk [vmem:[%s226] sm:$0xff] %vm250, %v377
      %392 = vst.msk [vmem:[%s226 + $0x8] sm:$0xff] %vm250, %v380
      %393 = vst.msk [vmem:[%s226 + $0x10] sm:$0xff] %vm250, %v385
      %394 = vst.msk [vmem:[%s226 + $0x18] sm:$0xff] %vm250, %v388
      %s395 = smul.u32 4, %s16
      %p396 = scmp.lt.s32.totalorder %s395, 7
      %s397 = scalar_select %p396, %s395, 7
      %s398 = smul.addr %s397, 8
      %s399 = scalar_lea.vmem %s5, %s398
      // Predicated region
      $region41: #{tpu_custom_call.1} parent=39 // pred_check
        %p400 = pneg %p144
      $region42: #{tpu_custom_call.1} parent=39 // pred_check_branch
        %402 = sbr.rel (%p400) target = $region44
      $region43: #{tpu_custom_call.1} parent=39 // pred_region
        %s403 = smul.u32 4, %s16
      $region44: #{tpu_custom_call.1} parent=39 // pred_fallthru
        _
    $region40: #{tpu_custom_call.1} parent=5 // pred_fallthru
      _
    %p404 = scmp.le.s32.totalorder 2, %s11
    // Predicated region
    $region45: #{tpu_custom_call.1} parent=5 // pred_check
      %p405 = pneg %p404
    $region46: #{tpu_custom_call.1} parent=5 // pred_check_branch
      %407 = sbr.rel (%p405) target = $region48
    $region47: #{tpu_custom_call.1} parent=5 // pred_region
      %s408 = ssub.s32 %s11, 2
      // Predicated region
      $region49: #{tpu_custom_call.1} parent=47 // pred_check
        %p409 = pneg %p150
      $region50: #{tpu_custom_call.1} parent=47 // pred_check_branch
        %411 = sbr.rel (%p409) target = $region52
      $region51: #{tpu_custom_call.1} parent=47 // pred_region
        %s412 = smul.u32 4, %s17
        %p413 = scmp.lt.s32.totalorder %s412, 7
        %s414 = scalar_select %p413, %s412, 7
        %s415 = smul.addr %s414, 8
        %s416 = scalar_lea.vmem %s5, %s415
      $region52: #{tpu_custom_call.1} parent=47 // pred_fallthru
        _
    $region48: #{tpu_custom_call.1} parent=5 // pred_fallthru
      _
  $region6: #{tpu_custom_call.1} parent=0 // loop_footer
    %s15 = sadd.s32 1, %s11
  $region7: #{tpu_custom_call.1} parent=0 // loop_footer_branch
    %10 = sbr.rel target = $region3
  $region8: #{tpu_custom_call.1} parent=0 // loop_exit
    _

</llo_original>
